<compile_context>
chip_gen: v7x
topology: tpu7x:2x2x1
jax: 0.10.0
libtpu: 0.0.40
codegen_flags: <defaults>
</compile_context>

<pallas_src>
import functools

import jax
import jax.numpy as jnp
from jax.experimental import pallas as pl
from jax.experimental.pallas import tpu as pltpu


def _round_up(x, m):
    return (x + m - 1) // m * m


# ---------------------------------------------------------------------------
# Kernel: both Linear heads fused, x read once.
# ---------------------------------------------------------------------------
def _two_heads_kernel(x_ref, wc_ref, bc_ref, wb_ref, bb_ref,
                      cls_ref, bbox_ref):
    # x: (tn, C) native dtype; w*: (C, out) compute dtype; b*: (1, out) f32.
    x = x_ref[...].astype(wc_ref.dtype)   # in-kernel cast: free VPU work
    cls = jnp.dot(x, wc_ref[...], preferred_element_type=jnp.float32)
    cls = cls + bc_ref[...]
    bbox = jnp.dot(x, wb_ref[...], preferred_element_type=jnp.float32)
    bbox = bbox + bb_ref[...]
    cls_ref[...] = cls.astype(cls_ref.dtype)
    bbox_ref[...] = bbox.astype(bbox_ref.dtype)


# ---------------------------------------------------------------------------
# One-time parameter prep (PyTorch (out, C) convention -> (C, out) slabs).
# ---------------------------------------------------------------------------
def prepare_two_heads_params(w_cls, b_cls, w_bbox, b_bbox,
                             compute_dtype=jnp.bfloat16):
    """Returns (w_cls_t, b_cls2, w_bbox_t, b_bbox2):
       w_*_t : (C, out) in compute_dtype, b_*2 : (1, out) float32."""
    w_cls_t = jnp.asarray(w_cls).T.astype(compute_dtype)
    w_bbox_t = jnp.asarray(w_bbox).T.astype(compute_dtype)
    b_cls2 = jnp.asarray(b_cls, jnp.float32).reshape(1, -1)
    b_bbox2 = jnp.asarray(b_bbox, jnp.float32).reshape(1, -1)
    return w_cls_t, b_cls2, w_bbox_t, b_bbox2


# ---------------------------------------------------------------------------
# Forward wrapper (matches TwoHeadsFastRCNNPredictor.forward semantics).
# ---------------------------------------------------------------------------
@functools.partial(jax.jit, static_argnames=("tile_n", "out_dtype"))
def two_heads_fastrcnn_predictor(x, w_cls_t, b_cls, w_bbox_t, b_bbox, *,
                                 tile_n=512, out_dtype=None):
    """x: (N, C, 1, 1) or (N, C).
    Returns (scores (N, num_classes + num_second_classes),
             bbox_deltas (N, 4 * num_classes)) in out_dtype (default x.dtype)."""
    if x.ndim == 4:
        assert x.shape[2] == 1 and x.shape[3] == 1, (
            "x has the wrong shape, expecting the last two dimensions to be "
            f"[1,1] instead of {list(x.shape[2:])}")
    x2d = x.reshape(x.shape[0], -1)
    n, c = x2d.shape
    assert w_cls_t.shape[0] == c and w_bbox_t.shape[0] == c
    cls_out = w_cls_t.shape[1]
    bbox_out = w_bbox_t.shape[1]
    odtype = x.dtype if out_dtype is None else jnp.dtype(out_dtype)

    if n == 0:  # empty ROI batch guard
        return (jnp.zeros((0, cls_out), odtype),
                jnp.zeros((0, bbox_out), odtype))

    assert tile_n > 0 and tile_n % 8 == 0, "tile_n must be a positive multiple of 8"
    # Row-tile floor: 16 for sub-32-bit (bf16) compute, 8 for f32.
    floor = 16 if jnp.dtype(w_cls_t.dtype).itemsize < 4 else 8
    tn = min(tile_n, _round_up(n, floor))
    if n > tile_n:
        # v7x: keep >= 2 grid steps so the 'parallel' axis engages both TCs.
        tn = min(tn, _round_up(pl.cdiv(n, 2), floor))
    grid = (pl.cdiv(n, tn),)

    cost = pl.CostEstimate(
        flops=2 * n * c * (cls_out + bbox_out),
        transcendentals=0,
        bytes_accessed=(x2d.size * x2d.dtype.itemsize
                        + w_cls_t.size * w_cls_t.dtype.itemsize
                        + w_bbox_t.size * w_bbox_t.dtype.itemsize
                        + (b_cls.size + b_bbox.size) * 4
                        + n * (cls_out + bbox_out) * jnp.dtype(odtype).itemsize),
    )

    scores, bbox_deltas = pl.pallas_call(
        _two_heads_kernel,
        out_shape=(jax.ShapeDtypeStruct((n, cls_out), odtype),
                   jax.ShapeDtypeStruct((n, bbox_out), odtype)),
        grid=grid,
        in_specs=[
            pl.BlockSpec((tn, c), lambda i: (i, 0)),         # x row tile
            pl.BlockSpec((c, cls_out), lambda i: (0, 0)),    # resident W_cls
            pl.BlockSpec((1, cls_out), lambda i: (0, 0)),    # resident b_cls
            pl.BlockSpec((c, bbox_out), lambda i: (0, 0)),   # resident W_bbox
            pl.BlockSpec((1, bbox_out), lambda i: (0, 0)),   # resident b_bbox
        ],
        out_specs=(pl.BlockSpec((tn, cls_out), lambda i: (i, 0)),
                   pl.BlockSpec((tn, bbox_out), lambda i: (i, 0))),
        compiler_params=pltpu.CompilerParams(
            dimension_semantics=("parallel",)),
        cost_estimate=cost,
    )(x2d, w_cls_t, b_cls, w_bbox_t, b_bbox)
    return scores, bbox_deltas


# ---------------------------------------------------------------------------
# Deterministic init mimicking nn.Linear (uniform(-1/sqrt(in), 1/sqrt(in))).
# ---------------------------------------------------------------------------
def _init_linear_params(key, out_features, in_features):
    kw, kb = jax.random.split(key)
    bound = 1.0 / jnp.sqrt(jnp.float32(in_features))
    w = jax.random.uniform(kw, (out_features, in_features), jnp.float32,
                           minval=-bound, maxval=bound)
    b = jax.random.uniform(kb, (out_features,), jnp.float32,
                           minval=-bound, maxval=bound)
    return w, b


if __name__ == "__main__":
    batch = 8
    in_channels = 32
    num_classes = 5
    num_second_classes = 3

    key = jax.random.PRNGKey(0)
    kx, kc, kb, kx2 = jax.random.split(key, 4)

    # Fast R-CNN head input: (N, C, 1, 1) pooled ROI features.
    x = jax.random.normal(kx, (batch, in_channels, 1, 1), jnp.float32)
    w_cls, b_cls = _init_linear_params(kc, num_classes + num_second_classes,
                                       in_channels)
    w_bbox, b_bbox = _init_linear_params(kb, num_classes * 4, in_channels)

    # Plain-JAX reference (PyTorch Linear semantics).
    x2d = x.reshape(batch, -1)
    ref_scores = x2d @ w_cls.T + b_cls
    ref_bbox = x2d @ w_bbox.T + b_bbox

    # --- f32 compute path: exact check ------------------------------------
    p32 = prepare_two_heads_params(w_cls, b_cls, w_bbox, b_bbox,
                                   compute_dtype=jnp.float32)
    s32, d32 = two_heads_fastrcnn_predictor(x, *p32)
    jax.block_until_ready((s32, d32))
    assert s32.shape == (batch, num_classes + num_second_classes)
    assert d32.shape == (batch, num_classes * 4)
    assert jnp.allclose(s32, ref_scores, atol=1e-5)
    assert jnp.allclose(d32, ref_bbox, atol=1e-5)

    # --- bf16 weight path (f32 MXU accumulation, f32 output) --------------
    p16 = prepare_two_heads_params(w_cls, b_cls, w_bbox, b_bbox,
                                   compute_dtype=jnp.bfloat16)
    s16, d16 = two_heads_fastrcnn_predictor(x, *p16, out_dtype=jnp.float32)
    jax.block_until_ready((s16, d16))
    assert jnp.allclose(s16, ref_scores, atol=5e-2)
    assert jnp.allclose(d16, ref_bbox, atol=5e-2)

    # --- large-N tiled / two-grid-step path, bf16 output fast path ---------
    big_n = 1000
    xb = jax.random.normal(kx2, (big_n, in_channels, 1, 1), jnp.float32)
    sb, db = two_heads_fastrcnn_predictor(xb, *p16, out_dtype=jnp.bfloat16)
    jax.block_until_ready((sb, db))
    xb2d = xb.reshape(big_n, -1)
    assert sb.shape == (big_n, num_classes + num_second_classes)
    assert db.shape == (big_n, num_classes * 4)
    assert jnp.allclose(sb.astype(jnp.float32), xb2d @ w_cls.T + b_cls, atol=1e-1)
    assert jnp.allclose(db.astype(jnp.float32), xb2d @ w_bbox.T + b_bbox, atol=1e-1)

    print("KERNEL_OK")
</pallas_src>

<mosaic_0001>
module attributes {stable_mosaic.version = 11 : i64} {
  func.func @_two_heads_kernel(%arg0: i32, %arg1: memref<8x32xf32, #tpu.memory_space<vmem>>, %arg2: memref<32x8xf32, #tpu.memory_space<vmem>>, %arg3: memref<1x8xf32, #tpu.memory_space<vmem>>, %arg4: memref<32x20xf32, #tpu.memory_space<vmem>>, %arg5: memref<1x20xf32, #tpu.memory_space<vmem>>, %arg6: memref<8x8xf32, #tpu.memory_space<vmem>>, %arg7: memref<8x20xf32, #tpu.memory_space<vmem>>) attributes {dimension_semantics = [#tpu.dimension_semantics<parallel>], iteration_bounds = array<i64: 1>, scalar_prefetch = 0 : i64, scratch_operands = 0 : i64, tpu.core_type = #tpu.core_type<tc>, window_params = [{transform_indices = @transform_0, window_bounds = array<i64: 8, 32>}, {pipeline_mode = #tpu.pipeline_mode<synchronous>, transform_indices = @transform_1, window_bounds = array<i64: 32, 8>}, {pipeline_mode = #tpu.pipeline_mode<synchronous>, transform_indices = @transform_2, window_bounds = array<i64: 1, 8>}, {pipeline_mode = #tpu.pipeline_mode<synchronous>, transform_indices = @transform_3, window_bounds = array<i64: 32, 20>}, {pipeline_mode = #tpu.pipeline_mode<synchronous>, transform_indices = @transform_4, window_bounds = array<i64: 1, 20>}, {transform_indices = @transform_5, window_bounds = array<i64: 8, 8>}, {transform_indices = @transform_6, window_bounds = array<i64: 8, 20>}]} {
    %c0 = arith.constant 0 : index
    %c0_0 = arith.constant 0 : index
    %0 = vector.load %arg1[%c0, %c0_0] : memref<8x32xf32, #tpu.memory_space<vmem>>, vector<8x32xf32>
    %c0_1 = arith.constant 0 : index
    %c0_2 = arith.constant 0 : index
    %1 = vector.load %arg2[%c0_1, %c0_2] : memref<32x8xf32, #tpu.memory_space<vmem>>, vector<32x8xf32>
    %cst = arith.constant dense<0.000000e+00> : vector<8x8xf32>
    %2 = tpu.matmul %0, %1, %cst {dimension_numbers = #tpu.dot_dimension_numbers<[1], [0], [0], [1], [0, 0, 1, 1], [], []>} : vector<8x32xf32>, vector<32x8xf32>, vector<8x8xf32> -> vector<8x8xf32>
    %c0_3 = arith.constant 0 : index
    %c0_4 = arith.constant 0 : index
    %3 = vector.load %arg3[%c0_3, %c0_4] : memref<1x8xf32, #tpu.memory_space<vmem>>, vector<1x8xf32>
    %4 = vector.broadcast %3 : vector<1x8xf32> to vector<8x8xf32>
    %5 = arith.addf %2, %4 : vector<8x8xf32>
    %c0_5 = arith.constant 0 : index
    %c0_6 = arith.constant 0 : index
    %6 = vector.load %arg4[%c0_5, %c0_6] : memref<32x20xf32, #tpu.memory_space<vmem>>, vector<32x20xf32>
    %cst_7 = arith.constant dense<0.000000e+00> : vector<8x20xf32>
    %7 = tpu.matmul %0, %6, %cst_7 {dimension_numbers = #tpu.dot_dimension_numbers<[1], [0], [0], [1], [0, 0, 1, 1], [], []>} : vector<8x32xf32>, vector<32x20xf32>, vector<8x20xf32> -> vector<8x20xf32>
    %c0_8 = arith.constant 0 : index
    %c0_9 = arith.constant 0 : index
    %8 = vector.load %arg5[%c0_8, %c0_9] : memref<1x20xf32, #tpu.memory_space<vmem>>, vector<1x20xf32>
    %9 = vector.broadcast %8 : vector<1x20xf32> to vector<8x20xf32>
    %10 = arith.addf %7, %9 : vector<8x20xf32>
    %c0_10 = arith.constant 0 : index
    %c0_11 = arith.constant 0 : index
    %11 = vector.load %arg6[%c0_10, %c0_11] : memref<8x8xf32, #tpu.memory_space<vmem>>, vector<8x8xf32>
    tpu.vector_store %arg6[%c0_10, %c0_11], %5 {strides = array<i32>} : memref<8x8xf32, #tpu.memory_space<vmem>>, vector<8x8xf32>,
    %c0_12 = arith.constant 0 : index
    %c0_13 = arith.constant 0 : index
    %12 = vector.load %arg7[%c0_12, %c0_13] : memref<8x20xf32, #tpu.memory_space<vmem>>, vector<8x20xf32>
    tpu.vector_store %arg7[%c0_12, %c0_13], %10 {strides = array<i32>} : memref<8x20xf32, #tpu.memory_space<vmem>>, vector<8x20xf32>,
    return
  }
  func.func @transform_0(%arg0: i32) -> (i32, i32) {
    %c0_i32 = arith.constant 0 : i32
    %c0_i32_0 = arith.constant 0 : i32
    return %arg0, %c0_i32 : i32, i32
  }
  func.func @transform_1(%arg0: i32) -> (i32, i32) {
    %c0_i32 = arith.constant 0 : i32
    %c0_i32_0 = arith.constant 0 : i32
    %c0_i32_1 = arith.constant 0 : i32
    return %c0_i32, %c0_i32_0 : i32, i32
  }
  func.func @transform_2(%arg0: i32) -> (i32, i32) {
    %c0_i32 = arith.constant 0 : i32
    %c0_i32_0 = arith.constant 0 : i32
    %c0_i32_1 = arith.constant 0 : i32
    return %c0_i32, %c0_i32_0 : i32, i32
  }
  func.func @transform_3(%arg0: i32) -> (i32, i32) {
    %c0_i32 = arith.constant 0 : i32
    %c0_i32_0 = arith.constant 0 : i32
    %c0_i32_1 = arith.constant 0 : i32
    return %c0_i32, %c0_i32_0 : i32, i32
  }
  func.func @transform_4(%arg0: i32) -> (i32, i32) {
    %c0_i32 = arith.constant 0 : i32
    %c0_i32_0 = arith.constant 0 : i32
    %c0_i32_1 = arith.constant 0 : i32
    return %c0_i32, %c0_i32_0 : i32, i32
  }
  func.func @transform_5(%arg0: i32) -> (i32, i32) {
    %c0_i32 = arith.constant 0 : i32
    %c0_i32_0 = arith.constant 0 : i32
    return %arg0, %c0_i32 : i32, i32
  }
  func.func @transform_6(%arg0: i32) -> (i32, i32) {
    %c0_i32 = arith.constant 0 : i32
    %c0_i32_0 = arith.constant 0 : i32
    return %arg0, %c0_i32 : i32, i32
  }
}

</mosaic_0001>

<llo_original>
// kernel: two_heads_fastrcnn_predictor.1
$region0: #{two_heads_fastrcnn_predictor.1}
  #allocation0 [shape = 'u32[]', space=smem, size = 0x4, offset = 0x4, fixed_abs, tag = 'smem constant byte address 0x4 - core index']
  #allocation1 [shape = 'u32[144,128]{1,0:T(1,128)}', space=vmem, size = 0x12000, scoped, tag = 'internal scratch']
  %s0 = inlined_call_operand.vmem [shape: f32[8,32], index: 0, kind: input, shape index: {}]
  %s1 = inlined_call_operand.vmem [shape: f32[32,8], index: 1, kind: input, shape index: {}]
  %s2 = inlined_call_operand.vmem [shape: f32[1,8], index: 2, kind: input, shape index: {}]
  %s3 = inlined_call_operand.vmem [shape: f32[32,20], index: 3, kind: input, shape index: {}]
  %s4 = inlined_call_operand.vmem [shape: f32[1,20], index: 4, kind: input, shape index: {}]
  %s5 = inlined_call_operand.hbm [shape: f32[8,8], index: 5, kind: output, shape index: {0}]
  %s6 = inlined_call_operand.hbm [shape: f32[8,20], index: 6, kind: output, shape index: {1}]
  %7 = xla_tuple %s5, %s6
  %s8 = sld [smem:[#allocation0]]
  $region38: #{two_heads_fastrcnn_predictor.1} parent=0
    _
  %s10 = ssub.s32 1, %s8
  %s11 = scalar_select 0, %s10, %s8
  $region1: #{two_heads_fastrcnn_predictor.1} parent=0
    #allocation2 [shape = 'u8[4096]{0}', space=vmem, size = 0x1000, scoped, tag = 'output window, operand 0, single buffered']
    #allocation3 [shape = 's32[1]{0}', space=sflag, size = 0x4, scoped, tag = 'scoped memory for two_heads_fastrcnn_predictor.1']
    #allocation4 [shape = 'u8[4096]{0}', space=vmem, size = 0x1000, scoped, tag = 'output window, operand 1, single buffered']
    #allocation5 [shape = 's32[1]{0}', space=sflag, size = 0x4, scoped, tag = 'scoped memory for two_heads_fastrcnn_predictor.1']
    %12 = vsyncpa [#allocation3], 0
    %13 = vsyncpa [#allocation5], 0
    // Predicated region
    $region2: #{two_heads_fastrcnn_predictor.1} parent=1 // pred_check
      _
    $region3: #{two_heads_fastrcnn_predictor.1} parent=1 // pred_check_branch
      %15 = sbr.rel (0) target = $region5
    $region4: #{two_heads_fastrcnn_predictor.1} parent=1 // pred_region
      _
    $region5: #{two_heads_fastrcnn_predictor.1} parent=1 // pred_fallthru
      _
    // Predicated region
    $region6: #{two_heads_fastrcnn_predictor.1} parent=1 // pred_check
      _
    $region7: #{two_heads_fastrcnn_predictor.1} parent=1 // pred_check_branch
      %17 = sbr.rel (0) target = $region9
    $region8: #{two_heads_fastrcnn_predictor.1} parent=1 // pred_region
      _
    $region9: #{two_heads_fastrcnn_predictor.1} parent=1 // pred_fallthru
      _
    // Predicated region
    $region10: #{two_heads_fastrcnn_predictor.1} parent=1 // pred_check
      _
    $region11: #{two_heads_fastrcnn_predictor.1} parent=1 // pred_check_branch
      %19 = sbr.rel (0) target = $region13
    $region12: #{two_heads_fastrcnn_predictor.1} parent=1 // pred_region
      _
    $region13: #{two_heads_fastrcnn_predictor.1} parent=1 // pred_fallthru
      _
    // Predicated region
    $region14: #{two_heads_fastrcnn_predictor.1} parent=1 // pred_check
      _
    $region15: #{two_heads_fastrcnn_predictor.1} parent=1 // pred_check_branch
      %21 = sbr.rel (0) target = $region17
    $region16: #{two_heads_fastrcnn_predictor.1} parent=1 // pred_region
      _
    $region17: #{two_heads_fastrcnn_predictor.1} parent=1 // pred_fallthru
      _
    // Predicated region
    $region18: #{two_heads_fastrcnn_predictor.1} parent=1 // pred_check
      _
    $region19: #{two_heads_fastrcnn_predictor.1} parent=1 // pred_check_branch
      %23 = sbr.rel (0) target = $region21
    $region20: #{two_heads_fastrcnn_predictor.1} parent=1 // pred_region
      _
    $region21: #{two_heads_fastrcnn_predictor.1} parent=1 // pred_fallthru
      _
    %v24 = vld [vmem:[%s0] sm:$0xff]
    %v25 = vld [vmem:[%s1] sm:$0xff]
    %v26 = vld [vmem:[%s1 + $0x8] sm:$0xff]
    %v27 = vld [vmem:[%s1 + $0x10] sm:$0xff]
    %v28 = vld [vmem:[%s1 + $0x18] sm:$0xff]
    %v29 = vld [vmem:[%s2] sm:$0x1]
    %v31 = vlaneseq
    %v32 = vshrl.u32 %v31, 7
    %v33 = vsub.s32 0, %v32
    %v34 = vrot.slane %v29, %v33
    %vm36 = vcmask 261120
    %v38 = vsel %vm36, %v24, 0
    %40 = vmatprep.subr.mxu0 0.0
    %41 = vmatpush1.msra.mxu0 %v25
    %42 = vmatprep.subr.mxu0 0.0
    %43 = vmatpush1.msra.mxu0 %v26
    %44 = vmatprep.subr.mxu0 0.0
    %45 = vmatpush1.msra.mxu0 %v27
    %46 = vmatprep.subr.mxu0 0.0
    %47 = vmatpush1.msra.mxu0 %v28
    %48 = vmatprep.subr.mxu0 0.0
    %49 = vmatpush1.msra.mxu0 0.0
    %50 = vmatprep.subr.mxu0 0.0
    %51 = vmatpush1.msra.mxu0 0.0
    %52 = vmatprep.subr.mxu0 0.0
    %53 = vmatpush1.msra.mxu0 0.0
    %54 = vmatprep.subr.mxu0 0.0
    %55 = vmatpush1.msra.mxu0 0.0
    %56 = vmatprep.subr.mxu0 0.0
    %57 = vmatpush1.msra.mxu0 0.0
    %58 = vmatprep.subr.mxu0 0.0
    %59 = vmatpush1.msra.mxu0 0.0
    %60 = vmatprep.subr.mxu0 0.0
    %61 = vmatpush1.msra.mxu0 0.0
    %62 = vmatprep.subr.mxu0 0.0
    %63 = vmatpush1.msra.mxu0 0.0
    %64 = vmatprep.subr.mxu0 0.0
    %65 = vmatpush1.msra.mxu0 0.0
    %66 = vmatprep.subr.mxu0 0.0
    %67 = vmatpush1.msra.mxu0 0.0
    %68 = vmatprep.subr.mxu0 0.0
    %69 = vmatpush1.msra.mxu0 0.0
    %70 = vmatprep.subr.mxu0 0.0
    %71 = vmatpush1.msra.mxu0 0.0
    %72 = vmatprep.subr.mxu0 0.0
    %73 = vmatpush1.msra.mxu0 0.0
    %74 = vmatprep.subr.mxu0 0.0
    %75 = vmatpush1.msra.mxu0 0.0
    %76 = vmatprep.subr.mxu0 0.0
    %77 = vmatpush1.msra.mxu0 0.0
    %78 = vmatprep.subr.mxu0 0.0
    %79 = vmatpush1.msra.mxu0 0.0
    %80 = vmatprep.subr.mxu0 0.0
    %81 = vmatpush1.msra.mxu0 0.0
    %82 = vmatprep.subr.mxu0 0.0
    %83 = vmatpush1.msra.mxu0 0.0
    %84 = vmatprep.subr.mxu0 0.0
    %85 = vmatpush1.msra.mxu0 0.0
    %86 = vmatprep.subr.mxu0 0.0
    %87 = vmatpush1.msra.mxu0 0.0
    %88 = vmatprep.subr.mxu0 0.0
    %89 = vmatpush1.msra.mxu0 0.0
    %90 = vmatprep.subr.mxu0 0.0
    %91 = vmatpush1.msra.mxu0 0.0
    %92 = vmatprep.subr.mxu0 0.0
    %93 = vmatpush1.msra.mxu0 0.0
    %94 = vmatprep.subr.mxu0 0.0
    %95 = vmatpush1.msra.mxu0 0.0
    %96 = vmatprep.subr.mxu0 0.0
    %97 = vmatpush1.msra.mxu0 0.0
    %98 = vmatprep.subr.mxu0 0.0
    %99 = vmatpush1.msra.mxu0 0.0
    %100 = vmatprep.subr.mxu0 0.0
    %101 = vmatpush1.msra.mxu0 0.0
    %102 = vmatprep.subr.mxu0 0.0
    %103 = vmatpush1.msra.mxu0 0.0
    %104 = vmatprep.mubr.f32.mxu0 0.0
    %105 = vmatmul.mubr.f32.gmra.mrb[0].mxu0 %v38
    %v106 = vpop.f32.mrb[0].mxu0
    %v107 = vadd.f32 %v34, %v106
    %v108 = vpop.f32.mrb[0].mxu0
    %109 = vdwg.mxu0
    %v110 = vld [vmem:[%s3] sm:$0xff]
    %v111 = vld [vmem:[%s3 + $0x8] sm:$0xff]
    %v112 = vld [vmem:[%s3 + $0x10] sm:$0xff]
    %v113 = vld [vmem:[%s3 + $0x18] sm:$0xff]
    %v114 = vld [vmem:[%s4] sm:$0x1]
    %v116 = vlaneseq
    %v117 = vshrl.u32 %v116, 7
    %v118 = vsub.s32 0, %v117
    %v119 = vrot.slane %v114, %v118
    %121 = vmatprep.subr.mxu0 0.0
    %122 = vmatpush1.msra.mxu0 %v110
    %123 = vmatprep.subr.mxu0 0.0
    %124 = vmatpush1.msra.mxu0 %v111
    %125 = vmatprep.subr.mxu0 0.0
    %126 = vmatpush1.msra.mxu0 %v112
    %127 = vmatprep.subr.mxu0 0.0
    %128 = vmatpush1.msra.mxu0 %v113
    %129 = vmatprep.subr.mxu0 0.0
    %130 = vmatpush1.msra.mxu0 0.0
    %131 = vmatprep.subr.mxu0 0.0
    %132 = vmatpush1.msra.mxu0 0.0
    %133 = vmatprep.subr.mxu0 0.0
    %134 = vmatpush1.msra.mxu0 0.0
    %135 = vmatprep.subr.mxu0 0.0
    %136 = vmatpush1.msra.mxu0 0.0
    %137 = vmatprep.subr.mxu0 0.0
    %138 = vmatpush1.msra.mxu0 0.0
    %139 = vmatprep.subr.mxu0 0.0
    %140 = vmatpush1.msra.mxu0 0.0
    %141 = vmatprep.subr.mxu0 0.0
    %142 = vmatpush1.msra.mxu0 0.0
    %143 = vmatprep.subr.mxu0 0.0
    %144 = vmatpush1.msra.mxu0 0.0
    %145 = vmatprep.subr.mxu0 0.0
    %146 = vmatpush1.msra.mxu0 0.0
    %147 = vmatprep.subr.mxu0 0.0
    %148 = vmatpush1.msra.mxu0 0.0
    %149 = vmatprep.subr.mxu0 0.0
    %150 = vmatpush1.msra.mxu0 0.0
    %151 = vmatprep.subr.mxu0 0.0
    %152 = vmatpush1.msra.mxu0 0.0
    %153 = vmatprep.subr.mxu0 0.0
    %154 = vmatpush1.msra.mxu0 0.0
    %155 = vmatprep.subr.mxu0 0.0
    %156 = vmatpush1.msra.mxu0 0.0
    %157 = vmatprep.subr.mxu0 0.0
    %158 = vmatpush1.msra.mxu0 0.0
    %159 = vmatprep.subr.mxu0 0.0
    %160 = vmatpush1.msra.mxu0 0.0
    %161 = vmatprep.subr.mxu0 0.0
    %162 = vmatpush1.msra.mxu0 0.0
    %163 = vmatprep.subr.mxu0 0.0
    %164 = vmatpush1.msra.mxu0 0.0
    %165 = vmatprep.subr.mxu0 0.0
    %166 = vmatpush1.msra.mxu0 0.0
    %167 = vmatprep.subr.mxu0 0.0
    %168 = vmatpush1.msra.mxu0 0.0
    %169 = vmatprep.subr.mxu0 0.0
    %170 = vmatpush1.msra.mxu0 0.0
    %171 = vmatprep.subr.mxu0 0.0
    %172 = vmatpush1.msra.mxu0 0.0
    %173 = vmatprep.subr.mxu0 0.0
    %174 = vmatpush1.msra.mxu0 0.0
    %175 = vmatprep.subr.mxu0 0.0
    %176 = vmatpush1.msra.mxu0 0.0
    %177 = vmatprep.subr.mxu0 0.0
    %178 = vmatpush1.msra.mxu0 0.0
    %179 = vmatprep.subr.mxu0 0.0
    %180 = vmatpush1.msra.mxu0 0.0
    %181 = vmatprep.subr.mxu0 0.0
    %182 = vmatpush1.msra.mxu0 0.0
    %183 = vmatprep.subr.mxu0 0.0
    %184 = vmatpush1.msra.mxu0 0.0
    %185 = vmatprep.mubr.f32.mxu0 0.0
    %186 = vmatmul.mubr.f32.gmra.mrb[0].mxu0 %v38
    %v187 = vpop.f32.mrb[0].mxu0
    %v188 = vadd.f32 %v119, %v187
    %v189 = vpop.f32.mrb[0].mxu0
    %190 = vdwg.mxu0
    %vm191 = vcmask 64512
    %192 = vst.msk [vmem:[#allocation2] sm:$0xff] %vm191, %v107
    %vm193 = vcmask 162816
    %194 = vst.msk [vmem:[#allocation4] sm:$0xff] %vm193, %v188
    // Predicated region
    $region22: #{two_heads_fastrcnn_predictor.1} parent=1 // pred_check
      _
    $region23: #{two_heads_fastrcnn_predictor.1} parent=1 // pred_check_branch
      %196 = sbr.rel (0) target = $region25
    $region24: #{two_heads_fastrcnn_predictor.1} parent=1 // pred_region
      %s198 = ssub.s32 128, 128
      %199 = vsyncadd [#allocation3], %s198
      %s201 = sshll.u32 [#allocation2], 4
      %s202 = int_to_ptr.vmem [resolvable:$true] %s201
      %204 = dma.vmem_to_hbm [thread:$0]  %s202, 128, %s5, [#allocation3]
    $region25: #{two_heads_fastrcnn_predictor.1} parent=1 // pred_fallthru
      _
    // Predicated region
    $region26: #{two_heads_fastrcnn_predictor.1} parent=1 // pred_check
      _
    $region27: #{two_heads_fastrcnn_predictor.1} parent=1 // pred_check_branch
      %206 = sbr.rel (0) target = $region29
    $region28: #{two_heads_fastrcnn_predictor.1} parent=1 // pred_region
      %s208 = ssub.s32 128, 128
      %209 = vsyncadd [#allocation5], %s208
      %s211 = sshll.u32 [#allocation4], 4
      %s212 = int_to_ptr.vmem [resolvable:$true] %s211
      %214 = dma.vmem_to_hbm [thread:$0]  %s212, 128, %s6, [#allocation5]
    $region29: #{two_heads_fastrcnn_predictor.1} parent=1 // pred_fallthru
      _
    // Predicated region
    $region30: #{two_heads_fastrcnn_predictor.1} parent=1 // pred_check
      _
    $region31: #{two_heads_fastrcnn_predictor.1} parent=1 // pred_check_branch
      %216 = sbr.rel (0) target = $region33
    $region32: #{two_heads_fastrcnn_predictor.1} parent=1 // pred_region
      %217 = dma.done [#allocation3], 128
    $region33: #{two_heads_fastrcnn_predictor.1} parent=1 // pred_fallthru
      _
    // Predicated region
    $region34: #{two_heads_fastrcnn_predictor.1} parent=1 // pred_check
      _
    $region35: #{two_heads_fastrcnn_predictor.1} parent=1 // pred_check_branch
      %219 = sbr.rel (0) target = $region37
    $region36: #{two_heads_fastrcnn_predictor.1} parent=1 // pred_region
      %220 = dma.done [#allocation5], 128
    $region37: #{two_heads_fastrcnn_predictor.1} parent=1 // pred_fallthru
      _
    %221 = vsyncpa [#allocation3], 1
    %222 = vsyncpa [#allocation5], 1

</llo_original>
